<compile_context>
chip_gen: v7x
topology: tpu7x:2x2x1
jax: 0.10.0
libtpu: 0.0.40
codegen_flags: <defaults>
</compile_context>

<pallas_src>
import jax
import jax.numpy as jnp
from jax.experimental import pallas as pl
from jax.experimental.pallas import tpu as pltpu


def _round_up(x, m):
    return ((x + m - 1) // m) * m


def _cdiv(a, b):
    return -(-a // b)


def _vmem_budget_bytes():
    """~3/4 of physical VMEM: ~96 MiB on v5e/v6e, ~48 MiB on v7x."""
    try:
        cap = int(pltpu.get_tpu_info().vmem_capacity_bytes)
    except Exception:
        cap = 64 * 1024 * 1024
    return max(16 * 1024 * 1024, (cap * 3) // 4)


def _pick_batch_tiling(B, block_b):
    """Return (tile_b, n_tiles).

    Prefers a multiple-of-8 tile that divides B exactly (no batch pad -> no
    extra HBM pass over the big image tensor) and gives >= 2 tiles (keeps both
    v7x TensorCores busy); falls back to a rounded tile with < tile_b pad rows.
    """
    if B < 16:
        return B, 1                      # single full-extent block, no pad
    best = None
    for tb in range(8, min(block_b, B // 2) + 1, 8):
        if B % tb == 0:
            best = tb
    if best is not None:
        return best, B // best
    n = max(2, _cdiv(B, block_b))
    tb = _round_up(_cdiv(B, n), 8)
    return tb, _cdiv(B, tb)


# ---------------------------------------------------------------------------
# Kernels
# ---------------------------------------------------------------------------
def _disc_kernel_resident(img_ref, ext_ref, w1i_ref, w1e_ref, b1_ref, w2_ref,
                          b2_ref, o_ref):
    # img: (TB, CHW) native dtype (cast to weight dtype just before the dot)
    # ext: (TB, EXTp) bf16        w1i: (CHW, Hp) bf16   (VMEM-resident)
    # b1/w2: (1, Hp) f32          w1e: (EXTp, Hp) bf16  (VMEM-resident)
    # b2: (1,) f32 in SMEM        o:  (TB, 1) f32
    h = jnp.dot(img_ref[...].astype(w1i_ref.dtype), w1i_ref[...],
                preferred_element_type=jnp.float32)
    h = h + jnp.dot(ext_ref[...], w1e_ref[...],
                    preferred_element_type=jnp.float32)
    h = h + b1_ref[...]
    h = jnp.where(h > 0, h, 0.2 * h)                      # LeakyReLU(0.2)
    # (H -> 1) layer as VPU multiply + XLU lane reduction (no degenerate MXU).
    o_ref[...] = jnp.sum(h * w2_ref[...], axis=-1, keepdims=True) + b2_ref[0]


def _disc_kernel_ktiled(img_ref, ext_ref, w1i_ref, w1e_ref, b1_ref, w2_ref,
                        b2_ref, o_ref, acc_ref):
    # K-tiled variant: grid = (batch_tiles, k_tiles), k last / "arbitrary".
    k = pl.program_id(1)

    @pl.when(k == 0)
    def _():
        # Fold the tiny domain/content contribution into the accumulator init.
        acc_ref[...] = jnp.dot(ext_ref[...], w1e_ref[...],
                               preferred_element_type=jnp.float32)

    acc_ref[...] += jnp.dot(img_ref[...].astype(w1i_ref.dtype), w1i_ref[...],
                            preferred_element_type=jnp.float32)

    @pl.when(k == pl.num_programs(1) - 1)
    def _():
        h = acc_ref[...] + b1_ref[...]
        h = jnp.where(h > 0, h, 0.2 * h)                  # LeakyReLU(0.2)
        o_ref[...] = (jnp.sum(h * w2_ref[...], axis=-1, keepdims=True)
                      + b2_ref[0])


# ---------------------------------------------------------------------------
# Wrapper
# ---------------------------------------------------------------------------
def code_discriminator(images, domains, contents, params, *,
                       block_b=512, block_k=2048, force_path=None):
    """images: (B,C,H,W)  domains: (B,ND)  contents: (B,NC)  -> logits (B,1)."""
    w1, b1, w2, b2 = params
    B = int(images.shape[0])
    chw = int(images.shape[1] * images.shape[2] * images.shape[3])
    ext_raw = int(domains.shape[1] + contents.shape[1])
    hidden = int(w1.shape[1])
    assert w1.shape[0] == chw + ext_raw

    weight_dtype = jnp.bfloat16
    hidden_p = _round_up(hidden, 128)          # full-lane MXU output / epilogue
    ext_p = _round_up(max(ext_raw, 1), 128)

    # ---- one-time weight prep (cheap vs. per-batch activation traffic) -----
    w1f = jnp.asarray(w1, jnp.float32)
    if hidden_p != hidden:
        w1f = jnp.pad(w1f, ((0, 0), (0, hidden_p - hidden)))
    w1_img = w1f[:chw].astype(weight_dtype)
    w1_ext = jnp.pad(w1f[chw:], ((0, ext_p - ext_raw), (0, 0))).astype(weight_dtype)
    b1_row = jnp.pad(jnp.asarray(b1, jnp.float32).reshape(1, hidden),
                     ((0, 0), (0, hidden_p - hidden)))
    w2_row = jnp.pad(jnp.asarray(w2, jnp.float32).reshape(1, hidden),
                     ((0, 0), (0, hidden_p - hidden)))
    b2_s = jnp.asarray(b2, jnp.float32).reshape(1,)

    # ---- activations: images streamed in native dtype (no pad / no cast of
    # the dominant (B, chw) tensor); tiny ext features padded+cast (negligible).
    img = images.reshape(B, chw)
    ext = jnp.concatenate([domains, contents], axis=-1)
    ext = jnp.pad(ext, ((0, 0), (0, ext_p - ext_raw))).astype(weight_dtype)

    tb, n_b = _pick_batch_tiling(B, block_b)
    b_p = tb * n_b
    if b_p != B:   # rare (no multiple-of-8 tile divides B); pad < tb rows
        img = jnp.pad(img, ((0, b_p - B), (0, 0)))
        ext = jnp.pad(ext, ((0, b_p - B), (0, 0)))

    img_isz = jnp.dtype(img.dtype).itemsize
    w_isz = jnp.dtype(weight_dtype).itemsize
    vmem_budget = _vmem_budget_bytes()

    # Estimated VMEM of the all-resident scheme (W1 single-buffered, streamed
    # activation tiles double-buffered, f32 h + bf16 cast temporaries).
    resident_bytes = (
        (chw + ext_p) * hidden_p * w_isz
        + 2 * tb * chw * img_isz
        + 2 * tb * ext_p * w_isz
        + tb * hidden_p * 4 + tb * chw * w_isz
        + 4 * hidden_p * 4 + 2 * tb * 4)
    use_resident = resident_bytes <= 0.7 * vmem_budget
    if force_path == "resident":
        use_resident = True
    elif force_path == "ktiled":
        use_resident = False

    if use_resident:
        cost = pl.CostEstimate(
            flops=int(2 * b_p * (chw + ext_p) * hidden_p + 4 * b_p * hidden_p),
            transcendentals=0,
            bytes_accessed=int(b_p * chw * img_isz + b_p * ext_p * w_isz
                               + (chw + ext_p) * hidden_p * w_isz
                               + 2 * hidden_p * 4 + b_p * 4))
        out = pl.pallas_call(
            _disc_kernel_resident,
            out_shape=jax.ShapeDtypeStruct((b_p, 1), jnp.float32),
            grid=(n_b,),
            in_specs=[
                pl.BlockSpec((tb, chw), lambda i: (i, 0)),        # image tile
                pl.BlockSpec((tb, ext_p), lambda i: (i, 0)),      # dom/content
                pl.BlockSpec((chw, hidden_p), lambda i: (0, 0),   # W1 (resident,
                             pipeline_mode=pl.Buffered(1)),       #  single-buf)
                pl.BlockSpec((ext_p, hidden_p), lambda i: (0, 0),
                             pipeline_mode=pl.Buffered(1)),
                pl.BlockSpec((1, hidden_p), lambda i: (0, 0),     # b1
                             pipeline_mode=pl.Buffered(1)),
                pl.BlockSpec((1, hidden_p), lambda i: (0, 0),     # w2 row
                             pipeline_mode=pl.Buffered(1)),
                pl.BlockSpec(memory_space=pltpu.MemorySpace.SMEM),  # b2 scalar
            ],
            out_specs=pl.BlockSpec((tb, 1), lambda i: (i, 0)),
            compiler_params=pltpu.CompilerParams(
                dimension_semantics=("parallel",),
                vmem_limit_bytes=int(vmem_budget)),
            cost_estimate=cost,
        )(img, ext, w1_img, w1_ext, b1_row, w2_row, b2_s)
    else:
        # K-tiled fallback: bounded VMEM regardless of C*H*W (v7x's 64 MiB).
        n_k = max(1, _cdiv(chw, block_k))
        tk = _round_up(_cdiv(chw, n_k), 128)
        chw_p = n_k * tk
        if chw_p != chw:
            # Zero-pad so every K block is in-bounds; costs one extra pass over
            # img, but only in the regime where W1 no longer fits VMEM.
            img = jnp.pad(img, ((0, 0), (0, chw_p - chw)))
            w1_img = jnp.pad(w1_img, ((0, chw_p - chw), (0, 0)))
        cost = pl.CostEstimate(
            flops=int(2 * b_p * (chw_p + ext_p) * hidden_p + 4 * b_p * hidden_p),
            transcendentals=0,
            bytes_accessed=int(b_p * chw_p * img_isz + b_p * ext_p * w_isz
                               + n_b * chw_p * hidden_p * w_isz
                               + ext_p * hidden_p * w_isz
                               + 2 * hidden_p * 4 + b_p * 4))
        out = pl.pallas_call(
            _disc_kernel_ktiled,
            out_shape=jax.ShapeDtypeStruct((b_p, 1), jnp.float32),
            grid=(n_b, n_k),
            in_specs=[
                pl.BlockSpec((tb, tk), lambda i, k: (i, k)),        # image K-tile
                pl.BlockSpec((tb, ext_p), lambda i, k: (i, 0)),     # dom/content
                pl.BlockSpec((tk, hidden_p), lambda i, k: (k, 0)),  # W1 K-tile
                pl.BlockSpec((ext_p, hidden_p), lambda i, k: (0, 0),
                             pipeline_mode=pl.Buffered(1)),
                pl.BlockSpec((1, hidden_p), lambda i, k: (0, 0),    # b1
                             pipeline_mode=pl.Buffered(1)),
                pl.BlockSpec((1, hidden_p), lambda i, k: (0, 0),    # w2 row
                             pipeline_mode=pl.Buffered(1)),
                pl.BlockSpec(memory_space=pltpu.MemorySpace.SMEM),  # b2 scalar
            ],
            out_specs=pl.BlockSpec((tb, 1), lambda i, k: (i, 0)),
            scratch_shapes=[pltpu.VMEM((tb, hidden_p), jnp.float32)],
            compiler_params=pltpu.CompilerParams(
                dimension_semantics=("parallel", "arbitrary"),
                vmem_limit_bytes=int(vmem_budget)),
            cost_estimate=cost,
        )(img, ext, w1_img, w1_ext, b1_row, w2_row, b2_s)

    return out[:B]


def init_params(key, d_in, hidden):
    k1, k2 = jax.random.split(key)
    w1 = jax.random.normal(k1, (d_in, hidden), jnp.float32) * (1.0 / jnp.sqrt(d_in))
    b1 = jnp.zeros((1, hidden), jnp.float32)
    w2 = jax.random.normal(k2, (hidden, 1), jnp.float32) * (1.0 / jnp.sqrt(hidden))
    b2 = jnp.zeros((1, 1), jnp.float32)
    return w1, b1, w2, b2


if __name__ == "__main__":
    key = jax.random.PRNGKey(0)
    k_img, k_dom, k_con, k_par = jax.random.split(key, 4)

    B, C, Himg, Wimg = 2, 4, 16, 16
    num_domains, num_contents = 4, 8
    HIDDEN = 32

    images = jax.random.normal(k_img, (B, C, Himg, Wimg), jnp.float32)
    domains = jax.random.normal(k_dom, (B, num_domains), jnp.float32)
    contents = jax.random.normal(k_con, (B, num_contents), jnp.float32)

    d_in = C * Himg * Wimg + num_domains + num_contents
    params = init_params(k_par, d_in, HIDDEN)

    # Auto path (picks the VMEM-resident kernel at these shapes).
    out = code_discriminator(images, domains, contents, params)
    # Also exercise the K-tiled accumulator path (block_k=512 -> 2 K steps).
    out_kt = code_discriminator(images, domains, contents, params,
                                force_path="ktiled", block_k=512)
    jax.block_until_ready((out, out_kt))

    # Plain-JAX reference of the same head, same bf16-stream / f32-accumulate
    # convention as the kernels.
    w1, b1, w2, b2 = params
    x = jnp.concatenate([images.reshape(B, -1), domains, contents], axis=-1)
    h = jnp.dot(x.astype(jnp.bfloat16), w1.astype(jnp.bfloat16),
                preferred_element_type=jnp.float32) + b1
    h = jnp.where(h > 0, h, 0.2 * h)
    ref = jnp.sum(h * w2.reshape(1, -1), axis=-1, keepdims=True) + b2.reshape(1, 1)

    assert out.shape == (B, 1) and out_kt.shape == (B, 1)
    assert jnp.allclose(out, ref, atol=2e-2, rtol=2e-2)
    assert jnp.allclose(out_kt, ref, atol=2e-2, rtol=2e-2)

    print("KERNEL_OK")
</pallas_src>

<mosaic_0001>
module attributes {stable_mosaic.version = 11 : i64} {
  func.func @_disc_kernel_resident(%arg0: i32, %arg1: memref<2x1024xf32, #tpu.memory_space<vmem>>, %arg2: memref<2x128xbf16, #tpu.memory_space<vmem>>, %arg3: memref<1024x128xbf16, #tpu.memory_space<vmem>>, %arg4: memref<128x128xbf16, #tpu.memory_space<vmem>>, %arg5: memref<1x128xf32, #tpu.memory_space<vmem>>, %arg6: memref<1x128xf32, #tpu.memory_space<vmem>>, %arg7: memref<1xf32, #tpu.memory_space<smem>>, %arg8: memref<2x1xf32, #tpu.memory_space<vmem>>) attributes {dimension_semantics = [#tpu.dimension_semantics<parallel>], iteration_bounds = array<i64: 1>, scalar_prefetch = 0 : i64, scratch_operands = 0 : i64, tpu.core_type = #tpu.core_type<tc>, window_params = [{transform_indices = @transform_0, window_bounds = array<i64: 2, 1024>}, {transform_indices = @transform_1, window_bounds = array<i64: 2, 128>}, {pipeline_mode = #tpu.pipeline_mode<synchronous>, transform_indices = @transform_2, window_bounds = array<i64: 1024, 128>}, {pipeline_mode = #tpu.pipeline_mode<synchronous>, transform_indices = @transform_3, window_bounds = array<i64: 128, 128>}, {pipeline_mode = #tpu.pipeline_mode<synchronous>, transform_indices = @transform_4, window_bounds = array<i64: 1, 128>}, {pipeline_mode = #tpu.pipeline_mode<synchronous>, transform_indices = @transform_5, window_bounds = array<i64: 1, 128>}, {transform_indices = @transform_6, window_bounds = array<i64: 1>}, {transform_indices = @transform_7, window_bounds = array<i64: 2, 1>}]} {
    %c0 = arith.constant 0 : index
    %c0_0 = arith.constant 0 : index
    %0 = vector.load %arg1[%c0, %c0_0] : memref<2x1024xf32, #tpu.memory_space<vmem>>, vector<2x1024xf32>
    %1 = arith.truncf %0 : vector<2x1024xf32> to vector<2x1024xbf16>
    %c0_1 = arith.constant 0 : index
    %c0_2 = arith.constant 0 : index
    %2 = vector.load %arg3[%c0_1, %c0_2] : memref<1024x128xbf16, #tpu.memory_space<vmem>>, vector<1024x128xbf16>
    %cst = arith.constant dense<0.000000e+00> : vector<2x128xf32>
    %3 = tpu.matmul %1, %2, %cst {dimension_numbers = #tpu.dot_dimension_numbers<[1], [0], [0], [1], [0, 0, 1, 1], [], []>} : vector<2x1024xbf16>, vector<1024x128xbf16>, vector<2x128xf32> -> vector<2x128xf32>
    %c0_3 = arith.constant 0 : index
    %c0_4 = arith.constant 0 : index
    %4 = vector.load %arg2[%c0_3, %c0_4] : memref<2x128xbf16, #tpu.memory_space<vmem>>, vector<2x128xbf16>
    %c0_5 = arith.constant 0 : index
    %c0_6 = arith.constant 0 : index
    %5 = vector.load %arg4[%c0_5, %c0_6] : memref<128x128xbf16, #tpu.memory_space<vmem>>, vector<128x128xbf16>
    %cst_7 = arith.constant dense<0.000000e+00> : vector<2x128xf32>
    %6 = tpu.matmul %4, %5, %cst_7 {dimension_numbers = #tpu.dot_dimension_numbers<[1], [0], [0], [1], [0, 0, 1, 1], [], []>} : vector<2x128xbf16>, vector<128x128xbf16>, vector<2x128xf32> -> vector<2x128xf32>
    %7 = arith.addf %3, %6 : vector<2x128xf32>
    %c0_8 = arith.constant 0 : index
    %c0_9 = arith.constant 0 : index
    %8 = vector.load %arg5[%c0_8, %c0_9] : memref<1x128xf32, #tpu.memory_space<vmem>>, vector<1x128xf32>
    %9 = vector.broadcast %8 : vector<1x128xf32> to vector<2x128xf32>
    %10 = arith.addf %7, %9 : vector<2x128xf32>
    %cst_10 = arith.constant 0.000000e+00 : f32
    %11 = vector.broadcast %cst_10 : f32 to vector<2x128xf32>
    %12 = arith.cmpf ogt, %10, %11 : vector<2x128xf32>
    %cst_11 = arith.constant 2.000000e-01 : f32
    %13 = vector.broadcast %cst_11 : f32 to vector<2x128xf32>
    %14 = arith.mulf %13, %10 : vector<2x128xf32>
    %15 = arith.select %12, %10, %14 : vector<2x128xi1>, vector<2x128xf32>
    %c0_12 = arith.constant 0 : index
    %c0_13 = arith.constant 0 : index
    %16 = vector.load %arg6[%c0_12, %c0_13] : memref<1x128xf32, #tpu.memory_space<vmem>>, vector<1x128xf32>
    %17 = vector.broadcast %16 : vector<1x128xf32> to vector<2x128xf32>
    %18 = arith.mulf %15, %17 : vector<2x128xf32>
    %cst_14 = arith.constant dense<0.000000e+00> : vector<2xf32>
    %19 = vector.multi_reduction <add>, %18, %cst_14 [1] : vector<2x128xf32> to vector<2xf32>
    %20 = vector.shape_cast %19 : vector<2xf32> to vector<2x1xf32>
    %c0_15 = arith.constant 0 : index
    %21 = memref.load %arg7[%c0_15] : memref<1xf32, #tpu.memory_space<smem>>
    %22 = vector.broadcast %21 : f32 to vector<2x1xf32>
    %23 = arith.addf %20, %22 : vector<2x1xf32>
    %c0_16 = arith.constant 0 : index
    %c0_17 = arith.constant 0 : index
    %24 = vector.load %arg8[%c0_16, %c0_17] : memref<2x1xf32, #tpu.memory_space<vmem>>, vector<2x1xf32>
    tpu.vector_store %arg8[%c0_16, %c0_17], %23 {strides = array<i32>} : memref<2x1xf32, #tpu.memory_space<vmem>>, vector<2x1xf32>,
    return
  }
  func.func @transform_0(%arg0: i32) -> (i32, i32) {
    %c0_i32 = arith.constant 0 : i32
    %c0_i32_0 = arith.constant 0 : i32
    return %arg0, %c0_i32 : i32, i32
  }
  func.func @transform_1(%arg0: i32) -> (i32, i32) {
    %c0_i32 = arith.constant 0 : i32
    %c0_i32_0 = arith.constant 0 : i32
    return %arg0, %c0_i32 : i32, i32
  }
  func.func @transform_2(%arg0: i32) -> (i32, i32) {
    %c0_i32 = arith.constant 0 : i32
    %c0_i32_0 = arith.constant 0 : i32
    %c0_i32_1 = arith.constant 0 : i32
    return %c0_i32, %c0_i32_0 : i32, i32
  }
  func.func @transform_3(%arg0: i32) -> (i32, i32) {
    %c0_i32 = arith.constant 0 : i32
    %c0_i32_0 = arith.constant 0 : i32
    %c0_i32_1 = arith.constant 0 : i32
    return %c0_i32, %c0_i32_0 : i32, i32
  }
  func.func @transform_4(%arg0: i32) -> (i32, i32) {
    %c0_i32 = arith.constant 0 : i32
    %c0_i32_0 = arith.constant 0 : i32
    %c0_i32_1 = arith.constant 0 : i32
    return %c0_i32, %c0_i32_0 : i32, i32
  }
  func.func @transform_5(%arg0: i32) -> (i32, i32) {
    %c0_i32 = arith.constant 0 : i32
    %c0_i32_0 = arith.constant 0 : i32
    %c0_i32_1 = arith.constant 0 : i32
    return %c0_i32, %c0_i32_0 : i32, i32
  }
  func.func @transform_6(%arg0: i32) -> i32 {
    %c0_i32 = arith.constant 0 : i32
    %c0_i32_0 = arith.constant 0 : i32
    return %c0_i32 : i32
  }
  func.func @transform_7(%arg0: i32) -> (i32, i32) {
    %c0_i32 = arith.constant 0 : i32
    %c0_i32_0 = arith.constant 0 : i32
    return %arg0, %c0_i32 : i32, i32
  }
}

</mosaic_0001>

<llo_original>
// kernel: tpu_custom_call.1
$region0: #{tpu_custom_call.1}
  #allocation0 [shape = 'u32[]', space=smem, size = 0x4, offset = 0x4, fixed_abs, tag = 'smem constant byte address 0x4 - core index']
  #allocation1 [shape = 'u32[144,128]{1,0:T(1,128)}', space=vmem, size = 0x12000, scoped, tag = 'internal scratch']
  #allocation2 [shape = 'f32[1]{0:T(128)S(6)}', space=smem, size = 0x200, scoped, tag = 'scoped memory for tpu_custom_call.1']
  %s0 = inlined_call_operand.hbm [shape: f32[2,1024], index: 0, kind: input, shape index: {}]
  %s1 = inlined_call_operand.vmem [shape: bf16[2,128], index: 1, kind: input, shape index: {}]
  %s2 = inlined_call_operand.hbm [shape: bf16[1024,128], index: 2, kind: input, shape index: {}]
  %s3 = inlined_call_operand.hbm [shape: bf16[128,128], index: 3, kind: input, shape index: {}]
  %s4 = inlined_call_operand.vmem [shape: f32[1,128], index: 4, kind: input, shape index: {}]
  %s5 = inlined_call_operand.vmem [shape: f32[1,128], index: 5, kind: input, shape index: {}]
  %s6 = inlined_call_operand.<no memory space> [shape: f32[1], index: 6, kind: input, shape index: {}]
  %s7 = inlined_call_operand.vmem [shape: f32[2,1], index: 7, kind: output, shape index: {}]
  %s8 = sld [smem:[#allocation0]]
  $region50: #{tpu_custom_call.1} parent=0
    _
  %s10 = ssub.s32 1, %s8
  %s11 = scalar_select 0, %s10, %s8
  %12 = sst [smem:[#allocation2]] %s6
  $region1: #{tpu_custom_call.1} parent=0
    #allocation3 [shape = 'u8[8192]{0}', space=vmem, size = 0x2000, scoped, tag = 'input window, operand 0, single buffered']
    #allocation4 [shape = 's32[1]{0}', space=sflag, size = 0x4, scoped, tag = 'scoped memory for tpu_custom_call.1']
    #allocation5 [shape = 'u8[262144]{0}', space=vmem, size = 0x40000, scoped, tag = 'input window, operand 2, single buffered']
    #allocation6 [shape = 's32[1]{0}', space=sflag, size = 0x4, scoped, tag = 'scoped memory for tpu_custom_call.1']
    #allocation7 [shape = 'u8[32768]{0}', space=vmem, size = 0x8000, scoped, tag = 'input window, operand 3, single buffered']
    %13 = vsyncpa [#allocation4], 0
    %14 = vsyncpa [#allocation6], 0
    // Predicated region
    $region2: #{tpu_custom_call.1} parent=1 // pred_check
      _
    $region3: #{tpu_custom_call.1} parent=1 // pred_check_branch
      %16 = sbr.rel (0) target = $region5
    $region4: #{tpu_custom_call.1} parent=1 // pred_region
      %s18 = ssub.s32 256, 256
      %19 = vsyncadd [#allocation4], %s18
      %s21 = sshll.u32 [#allocation3], 4
      %s22 = int_to_ptr.vmem [resolvable:$true] %s21
      %24 = dma.hbm_to_vmem [thread:$0]  %s0, 256, %s22, [#allocation4]
    $region5: #{tpu_custom_call.1} parent=1 // pred_fallthru
      _
    // Predicated region
    $region6: #{tpu_custom_call.1} parent=1 // pred_check
      _
    $region7: #{tpu_custom_call.1} parent=1 // pred_check_branch
      %26 = sbr.rel (0) target = $region9
    $region8: #{tpu_custom_call.1} parent=1 // pred_region
      _
    $region9: #{tpu_custom_call.1} parent=1 // pred_fallthru
      _
    // Predicated region
    $region10: #{tpu_custom_call.1} parent=1 // pred_check
      _
    $region11: #{tpu_custom_call.1} parent=1 // pred_check_branch
      %28 = sbr.rel (0) target = $region13
    $region12: #{tpu_custom_call.1} parent=1 // pred_region
      %s30 = ssub.s32 8192, 8192
      %31 = vsyncadd [#allocation6], %s30
      %s32 = sshll.u32 [#allocation5], 4
      %s33 = int_to_ptr.vmem [resolvable:$true] %s32
      %38 = dma.hbm_to_vmem [thread:$0]  %s2, 8192, %s33, [#allocation6], 64, 64, 4
    $region13: #{tpu_custom_call.1} parent=1 // pred_fallthru
      _
    // Predicated region
    $region14: #{tpu_custom_call.1} parent=1 // pred_check
      _
    $region15: #{tpu_custom_call.1} parent=1 // pred_check_branch
      %40 = sbr.rel (0) target = $region17
    $region16: #{tpu_custom_call.1} parent=1 // pred_region
      %s42 = ssub.s32 1024, 1024
      %43 = vsyncadd [#allocation6], %s42
      %s44 = sshll.u32 [#allocation7], 4
      %s45 = int_to_ptr.vmem [resolvable:$true] %s44
      %50 = dma.hbm_to_vmem [thread:$0]  %s3, 1024, %s45, [#allocation6], 64, 64, 4
    $region17: #{tpu_custom_call.1} parent=1 // pred_fallthru
      _
    // Predicated region
    $region18: #{tpu_custom_call.1} parent=1 // pred_check
      _
    $region19: #{tpu_custom_call.1} parent=1 // pred_check_branch
      %52 = sbr.rel (0) target = $region21
    $region20: #{tpu_custom_call.1} parent=1 // pred_region
      _
    $region21: #{tpu_custom_call.1} parent=1 // pred_fallthru
      _
    // Predicated region
    $region22: #{tpu_custom_call.1} parent=1 // pred_check
      _
    $region23: #{tpu_custom_call.1} parent=1 // pred_check_branch
      %54 = sbr.rel (0) target = $region25
    $region24: #{tpu_custom_call.1} parent=1 // pred_region
      _
    $region25: #{tpu_custom_call.1} parent=1 // pred_fallthru
      _
    // Predicated region
    $region26: #{tpu_custom_call.1} parent=1 // pred_check
      _
    $region27: #{tpu_custom_call.1} parent=1 // pred_check_branch
      %56 = sbr.rel (0) target = $region29
    $region28: #{tpu_custom_call.1} parent=1 // pred_region
      _
    $region29: #{tpu_custom_call.1} parent=1 // pred_fallthru
      _
    // Predicated region
    $region30: #{tpu_custom_call.1} parent=1 // pred_check
      _
    $region31: #{tpu_custom_call.1} parent=1 // pred_check_branch
      %58 = sbr.rel (0) target = $region33
    $region32: #{tpu_custom_call.1} parent=1 // pred_region
      %59 = dma.done [#allocation4], 256
    $region33: #{tpu_custom_call.1} parent=1 // pred_fallthru
      _
    // Predicated region
    $region34: #{tpu_custom_call.1} parent=1 // pred_check
      _
    $region35: #{tpu_custom_call.1} parent=1 // pred_check_branch
      %61 = sbr.rel (0) target = $region37
    $region36: #{tpu_custom_call.1} parent=1 // pred_region
      %62 = dma.done [#allocation6], 8192
    $region37: #{tpu_custom_call.1} parent=1 // pred_fallthru
      _
    // Predicated region
    $region38: #{tpu_custom_call.1} parent=1 // pred_check
      _
    $region39: #{tpu_custom_call.1} parent=1 // pred_check_branch
      %64 = sbr.rel (0) target = $region41
    $region40: #{tpu_custom_call.1} parent=1 // pred_region
      %65 = dma.done [#allocation6], 1024
    $region41: #{tpu_custom_call.1} parent=1 // pred_fallthru
      _
    %v67 = vld [vmem:[#allocation3] sm:$0xff]
    %v68 = vld [vmem:[#allocation3 + $0x8] sm:$0xff]
    %v71 = vcombine.high %v67, %v67
    %v73 = vunpack.c.l.s4 1983009808
    %v74 = vunpack.c.0.s8 %v73
    %v75 = vlaneseq
    %v76 = vshrl.u32 %v75, 7
    %v77 = vsub.s32 %v74, %v76
    %v78 = vrot.slane %v67, %v77
    %v80 = vunpack.c.l.s4 1983009808
    %v81 = vunpack.c.0.s8 %v80
    %v82 = vlaneseq
    %v83 = vshrl.u32 %v82, 7
    %v84 = vsub.s32 %v81, %v83
    %v85 = vrot.slane %v71, %v84
    %v86 = vcombine.high %v78, %v78
    %v87 = vcombine.high %v85, %v85
    %v88 = vcombine.high %v68, %v68
    %v90 = vunpack.c.l.s4 1983009808
    %v91 = vunpack.c.0.s8 %v90
    %v92 = vlaneseq
    %v93 = vshrl.u32 %v92, 7
    %v94 = vsub.s32 %v91, %v93
    %v95 = vrot.slane %v68, %v94
    %v97 = vunpack.c.l.s4 1983009808
    %v98 = vunpack.c.0.s8 %v97
    %v99 = vlaneseq
    %v100 = vshrl.u32 %v99, 7
    %v101 = vsub.s32 %v98, %v100
    %v102 = vrot.slane %v88, %v101
    %v103 = vcombine.high %v95, %v95
    %v104 = vcombine.high %v102, %v102
    %v113 = vpack.c.bf16 %v78, %v78
    %v114 = vpack.c.bf16 %v86, %v86
    %v115 = vpack.c.bf16 %v85, %v85
    %v116 = vpack.c.bf16 %v87, %v87
    %v117 = vpack.c.bf16 %v95, %v95
    %v118 = vpack.c.bf16 %v103, %v103
    %v119 = vpack.c.bf16 %v102, %v102
    %v120 = vpack.c.bf16 %v104, %v104
    %v121 = vld [vmem:[#allocation5] sm:$0xf]
    %v122 = vld [vmem:[#allocation5 + $0x4] sm:$0xf]
    %v123 = vld [vmem:[#allocation5 + $0x8] sm:$0xf]
    %v124 = vld [vmem:[#allocation5 + $0xc] sm:$0xf]
    %v125 = vld [vmem:[#allocation5 + $0x10] sm:$0xf]
    %v126 = vld [vmem:[#allocation5 + $0x14] sm:$0xf]
    %v127 = vld [vmem:[#allocation5 + $0x18] sm:$0xf]
    %v128 = vld [vmem:[#allocation5 + $0x1c] sm:$0xf]
    %v129 = vld [vmem:[#allocation5 + $0x20] sm:$0xf]
    %v130 = vld [vmem:[#allocation5 + $0x24] sm:$0xf]
    %v131 = vld [vmem:[#allocation5 + $0x28] sm:$0xf]
    %v132 = vld [vmem:[#allocation5 + $0x2c] sm:$0xf]
    %v133 = vld [vmem:[#allocation5 + $0x30] sm:$0xf]
    %v134 = vld [vmem:[#allocation5 + $0x34] sm:$0xf]
    %v135 = vld [vmem:[#allocation5 + $0x38] sm:$0xf]
    %v136 = vld [vmem:[#allocation5 + $0x3c] sm:$0xf]
    %v137 = vld [vmem:[#allocation5 + $0x40] sm:$0xf]
    %v138 = vld [vmem:[#allocation5 + $0x44] sm:$0xf]
    %v139 = vld [vmem:[#allocation5 + $0x48] sm:$0xf]
    %v140 = vld [vmem:[#allocation5 + $0x4c] sm:$0xf]
    %v141 = vld [vmem:[#allocation5 + $0x50] sm:$0xf]
    %v142 = vld [vmem:[#allocation5 + $0x54] sm:$0xf]
    %v143 = vld [vmem:[#allocation5 + $0x58] sm:$0xf]
    %v144 = vld [vmem:[#allocation5 + $0x5c] sm:$0xf]
    %v145 = vld [vmem:[#allocation5 + $0x60] sm:$0xf]
    %v146 = vld [vmem:[#allocation5 + $0x64] sm:$0xf]
    %v147 = vld [vmem:[#allocation5 + $0x68] sm:$0xf]
    %v148 = vld [vmem:[#allocation5 + $0x6c] sm:$0xf]
    %v149 = vld [vmem:[#allocation5 + $0x70] sm:$0xf]
    %v150 = vld [vmem:[#allocation5 + $0x74] sm:$0xf]
    %v151 = vld [vmem:[#allocation5 + $0x78] sm:$0xf]
    %v152 = vld [vmem:[#allocation5 + $0x7c] sm:$0xf]
    %v153 = vld [vmem:[#allocation5 + $0x80] sm:$0xf]
    %v154 = vld [vmem:[#allocation5 + $0x84] sm:$0xf]
    %v155 = vld [vmem:[#allocation5 + $0x88] sm:$0xf]
    %v156 = vld [vmem:[#allocation5 + $0x8c] sm:$0xf]
    %v157 = vld [vmem:[#allocation5 + $0x90] sm:$0xf]
    %v158 = vld [vmem:[#allocation5 + $0x94] sm:$0xf]
    %v159 = vld [vmem:[#allocation5 + $0x98] sm:$0xf]
    %v160 = vld [vmem:[#allocation5 + $0x9c] sm:$0xf]
    %v161 = vld [vmem:[#allocation5 + $0xa0] sm:$0xf]
    %v162 = vld [vmem:[#allocation5 + $0xa4] sm:$0xf]
    %v163 = vld [vmem:[#allocation5 + $0xa8] sm:$0xf]
    %v164 = vld [vmem:[#allocation5 + $0xac] sm:$0xf]
    %v165 = vld [vmem:[#allocation5 + $0xb0] sm:$0xf]
    %v166 = vld [vmem:[#allocation5 + $0xb4] sm:$0xf]
    %v167 = vld [vmem:[#allocation5 + $0xb8] sm:$0xf]
    %v168 = vld [vmem:[#allocation5 + $0xbc] sm:$0xf]
    %v169 = vld [vmem:[#allocation5 + $0xc0] sm:$0xf]
    %v170 = vld [vmem:[#allocation5 + $0xc4] sm:$0xf]
    %v171 = vld [vmem:[#allocation5 + $0xc8] sm:$0xf]
    %v172 = vld [vmem:[#allocation5 + $0xcc] sm:$0xf]
    %v173 = vld [vmem:[#allocation5 + $0xd0] sm:$0xf]
    %v174 = vld [vmem:[#allocation5 + $0xd4] sm:$0xf]
    %v175 = vld [vmem:[#allocation5 + $0xd8] sm:$0xf]
    %v176 = vld [vmem:[#allocation5 + $0xdc] sm:$0xf]
    %v177 = vld [vmem:[#allocation5 + $0xe0] sm:$0xf]
    %v178 = vld [vmem:[#allocation5 + $0xe4] sm:$0xf]
    %v179 = vld [vmem:[#allocation5 + $0xe8] sm:$0xf]
    %v180 = vld [vmem:[#allocation5 + $0xec] sm:$0xf]
    %v181 = vld [vmem:[#allocation5 + $0xf0] sm:$0xf]
    %v182 = vld [vmem:[#allocation5 + $0xf4] sm:$0xf]
    %v183 = vld [vmem:[#allocation5 + $0xf8] sm:$0xf]
    %v184 = vld [vmem:[#allocation5 + $0xfc] sm:$0xf]
    %v185 = vld [vmem:[#allocation5 + $0x100] sm:$0xf]
    %v186 = vld [vmem:[#allocation5 + $0x104] sm:$0xf]
    %v187 = vld [vmem:[#allocation5 + $0x108] sm:$0xf]
    %v188 = vld [vmem:[#allocation5 + $0x10c] sm:$0xf]
    %v189 = vld [vmem:[#allocation5 + $0x110] sm:$0xf]
    %v190 = vld [vmem:[#allocation5 + $0x114] sm:$0xf]
    %v191 = vld [vmem:[#allocation5 + $0x118] sm:$0xf]
    %v192 = vld [vmem:[#allocation5 + $0x11c] sm:$0xf]
    %v193 = vld [vmem:[#allocation5 + $0x120] sm:$0xf]
    %v194 = vld [vmem:[#allocation5 + $0x124] sm:$0xf]
    %v195 = vld [vmem:[#allocation5 + $0x128] sm:$0xf]
    %v196 = vld [vmem:[#allocation5 + $0x12c] sm:$0xf]
    %v197 = vld [vmem:[#allocation5 + $0x130] sm:$0xf]
    %v198 = vld [vmem:[#allocation5 + $0x134] sm:$0xf]
    %v199 = vld [vmem:[#allocation5 + $0x138] sm:$0xf]
    %v200 = vld [vmem:[#allocation5 + $0x13c] sm:$0xf]
    %v201 = vld [vmem:[#allocation5 + $0x140] sm:$0xf]
    %v202 = vld [vmem:[#allocation5 + $0x144] sm:$0xf]
    %v203 = vld [vmem:[#allocation5 + $0x148] sm:$0xf]
    %v204 = vld [vmem:[#allocation5 + $0x14c] sm:$0xf]
    %v205 = vld [vmem:[#allocation5 + $0x150] sm:$0xf]
    %v206 = vld [vmem:[#allocation5 + $0x154] sm:$0xf]
    %v207 = vld [vmem:[#allocation5 + $0x158] sm:$0xf]
    %v208 = vld [vmem:[#allocation5 + $0x15c] sm:$0xf]
    %v209 = vld [vmem:[#allocation5 + $0x160] sm:$0xf]
    %v210 = vld [vmem:[#allocation5 + $0x164] sm:$0xf]
    %v211 = vld [vmem:[#allocation5 + $0x168] sm:$0xf]
    %v212 = vld [vmem:[#allocation5 + $0x16c] sm:$0xf]
    %v213 = vld [vmem:[#allocation5 + $0x170] sm:$0xf]
    %v214 = vld [vmem:[#allocation5 + $0x174] sm:$0xf]
    %v215 = vld [vmem:[#allocation5 + $0x178] sm:$0xf]
    %v216 = vld [vmem:[#allocation5 + $0x17c] sm:$0xf]
    %v217 = vld [vmem:[#allocation5 + $0x180] sm:$0xf]
    %v218 = vld [vmem:[#allocation5 + $0x184] sm:$0xf]
    %v219 = vld [vmem:[#allocation5 + $0x188] sm:$0xf]
    %v220 = vld [vmem:[#allocation5 + $0x18c] sm:$0xf]
    %v221 = vld [vmem:[#allocation5 + $0x190] sm:$0xf]
    %v222 = vld [vmem:[#allocation5 + $0x194] sm:$0xf]
    %v223 = vld [vmem:[#allocation5 + $0x198] sm:$0xf]
    %v224 = vld [vmem:[#allocation5 + $0x19c] sm:$0xf]
    %v225 = vld [vmem:[#allocation5 + $0x1a0] sm:$0xf]
    %v226 = vld [vmem:[#allocation5 + $0x1a4] sm:$0xf]
    %v227 = vld [vmem:[#allocation5 + $0x1a8] sm:$0xf]
    %v228 = vld [vmem:[#allocation5 + $0x1ac] sm:$0xf]
    %v229 = vld [vmem:[#allocation5 + $0x1b0] sm:$0xf]
    %v230 = vld [vmem:[#allocation5 + $0x1b4] sm:$0xf]
    %v231 = vld [vmem:[#allocation5 + $0x1b8] sm:$0xf]
    %v232 = vld [vmem:[#allocation5 + $0x1bc] sm:$0xf]
    %v233 = vld [vmem:[#allocation5 + $0x1c0] sm:$0xf]
    %v234 = vld [vmem:[#allocation5 + $0x1c4] sm:$0xf]
    %v235 = vld [vmem:[#allocation5 + $0x1c8] sm:$0xf]
    %v236 = vld [vmem:[#allocation5 + $0x1cc] sm:$0xf]
    %v237 = vld [vmem:[#allocation5 + $0x1d0] sm:$0xf]
    %v238 = vld [vmem:[#allocation5 + $0x1d4] sm:$0xf]
    %v239 = vld [vmem:[#allocation5 + $0x1d8] sm:$0xf]
    %v240 = vld [vmem:[#allocation5 + $0x1dc] sm:$0xf]
    %v241 = vld [vmem:[#allocation5 + $0x1e0] sm:$0xf]
    %v242 = vld [vmem:[#allocation5 + $0x1e4] sm:$0xf]
    %v243 = vld [vmem:[#allocation5 + $0x1e8] sm:$0xf]
    %v244 = vld [vmem:[#allocation5 + $0x1ec] sm:$0xf]
    %v245 = vld [vmem:[#allocation5 + $0x1f0] sm:$0xf]
    %v246 = vld [vmem:[#allocation5 + $0x1f4] sm:$0xf]
    %v247 = vld [vmem:[#allocation5 + $0x1f8] sm:$0xf]
    %v248 = vld [vmem:[#allocation5 + $0x1fc] sm:$0xf]
    %v249 = vld [vmem:[%s1] sm:$0x1]
    %v250 = vld [vmem:[#allocation7] sm:$0xf]
    %v251 = vld [vmem:[#allocation7 + $0x4] sm:$0xf]
    %v252 = vld [vmem:[#allocation7 + $0x8] sm:$0xf]
    %v253 = vld [vmem:[#allocation7 + $0xc] sm:$0xf]
    %v254 = vld [vmem:[#allocation7 + $0x10] sm:$0xf]
    %v255 = vld [vmem:[#allocation7 + $0x14] sm:$0xf]
    %v256 = vld [vmem:[#allocation7 + $0x18] sm:$0xf]
    %v257 = vld [vmem:[#allocation7 + $0x1c] sm:$0xf]
    %v258 = vld [vmem:[#allocation7 + $0x20] sm:$0xf]
    %v259 = vld [vmem:[#allocation7 + $0x24] sm:$0xf]
    %v260 = vld [vmem:[#allocation7 + $0x28] sm:$0xf]
    %v261 = vld [vmem:[#allocation7 + $0x2c] sm:$0xf]
    %v262 = vld [vmem:[#allocation7 + $0x30] sm:$0xf]
    %v263 = vld [vmem:[#allocation7 + $0x34] sm:$0xf]
    %v264 = vld [vmem:[#allocation7 + $0x38] sm:$0xf]
    %v265 = vld [vmem:[#allocation7 + $0x3c] sm:$0xf]
    %v282 = vunpack.c.l.b16 %v250
    %v283 = vunpack.c.l.b16 %v251
    %v284 = vunpack.c.l.b16 %v252
    %v285 = vunpack.c.l.b16 %v253
    %v286 = vunpack.c.l.b16 %v254
    %v287 = vunpack.c.l.b16 %v255
    %v288 = vunpack.c.l.b16 %v256
    %v289 = vunpack.c.l.b16 %v257
    %v290 = vunpack.c.l.b16 %v258
    %v291 = vunpack.c.l.b16 %v259
    %v292 = vunpack.c.l.b16 %v260
    %v293 = vunpack.c.l.b16 %v261
    %v294 = vunpack.c.l.b16 %v262
    %v295 = vunpack.c.l.b16 %v263
    %v296 = vunpack.c.l.b16 %v264
    %v297 = vunpack.c.l.b16 %v265
    %v298 = vpack.c.b16 %v283, %v282
    %v299 = vpack.c.b16 %v285, %v284
    %v300 = vpack.c.b16 %v287, %v286
    %v301 = vpack.c.b16 %v289, %v288
    %v302 = vpack.c.b16 %v291, %v290
    %v303 = vpack.c.b16 %v293, %v292
    %v304 = vpack.c.b16 %v295, %v294
    %v305 = vpack.c.b16 %v297, %v296
    %314 = vmatprep.subr.bf16.mxu0 0
    %315 = vmatpush1.bf16.msra.mxu0 %v298
    %316 = vmatprep.subr.bf16.mxu0 0
    %317 = vmatpush1.bf16.msra.mxu0 %v299
    %318 = vmatprep.subr.bf16.mxu0 0
    %319 = vmatpush1.bf16.msra.mxu0 %v300
    %320 = vmatprep.subr.bf16.mxu0 0
    %321 = vmatpush1.bf16.msra.mxu0 %v301
    %322 = vmatprep.subr.bf16.mxu0 0
    %323 = vmatpush1.bf16.msra.mxu0 %v302
    %324 = vmatprep.subr.bf16.mxu0 0
    %325 = vmatpush1.bf16.msra.mxu0 %v303
    %326 = vmatprep.subr.bf16.mxu0 0
    %327 = vmatpush1.bf16.msra.mxu0 %v304
    %328 = vmatprep.subr.bf16.mxu0 0
    %329 = vmatpush1.bf16.msra.mxu0 %v305
    %330 = vmatprep.subr.bf16.mxu0 0
    %331 = vmatpush1.bf16.msra.mxu0 0
    %332 = vmatprep.subr.bf16.mxu0 0
    %333 = vmatpush1.bf16.msra.mxu0 0
    %334 = vmatprep.subr.bf16.mxu0 0
    %335 = vmatpush1.bf16.msra.mxu0 0
    %336 = vmatprep.subr.bf16.mxu0 0
    %337 = vmatpush1.bf16.msra.mxu0 0
    %338 = vmatprep.subr.bf16.mxu0 0
    %339 = vmatpush1.bf16.msra.mxu0 0
    %340 = vmatprep.subr.bf16.mxu0 0
    %341 = vmatpush1.bf16.msra.mxu0 0
    %342 = vmatprep.subr.bf16.mxu0 0
    %343 = vmatpush1.bf16.msra.mxu0 0
    %344 = vmatprep.subr.bf16.mxu0 0
    %345 = vmatpush1.bf16.msra.mxu0 0
    %346 = vmatprep.mubr.bf16.mxu0 0
    %347 = vmatmul.mubr.bf16.gmra.mrb[0].mxu0 %v249
    %v348 = vpop.f32.mrb[0].mxu0
    %v349 = vadd.f32 0.0, %v348
    %v350 = vpop.f32.mrb[0].mxu0
    %v351 = vpop.f32.mrb[0].mxu0
    %v352 = vpop.f32.mrb[0].mxu0
    %353 = vdwg.mxu0
    %v482 = vunpack.c.l.b16 %v121
    %v483 = vunpack.c.l.b16 %v122
    %v484 = vunpack.c.l.b16 %v123
    %v485 = vunpack.c.l.b16 %v124
    %v486 = vunpack.c.l.b16 %v125
    %v487 = vunpack.c.l.b16 %v126
    %v488 = vunpack.c.l.b16 %v127
    %v489 = vunpack.c.l.b16 %v128
    %v490 = vunpack.c.l.b16 %v129
    %v491 = vunpack.c.l.b16 %v130
    %v492 = vunpack.c.l.b16 %v131
    %v493 = vunpack.c.l.b16 %v132
    %v494 = vunpack.c.l.b16 %v133
    %v495 = vunpack.c.l.b16 %v134
    %v496 = vunpack.c.l.b16 %v135
    %v497 = vunpack.c.l.b16 %v136
    %v498 = vunpack.c.l.b16 %v137
    %v499 = vunpack.c.l.b16 %v138
    %v500 = vunpack.c.l.b16 %v139
    %v501 = vunpack.c.l.b16 %v140
    %v502 = vunpack.c.l.b16 %v141
    %v503 = vunpack.c.l.b16 %v142
    %v504 = vunpack.c.l.b16 %v143
    %v505 = vunpack.c.l.b16 %v144
    %v506 = vunpack.c.l.b16 %v145
    %v507 = vunpack.c.l.b16 %v146
    %v508 = vunpack.c.l.b16 %v147
    %v509 = vunpack.c.l.b16 %v148
    %v510 = vunpack.c.l.b16 %v149
    %v511 = vunpack.c.l.b16 %v150
    %v512 = vunpack.c.l.b16 %v151
    %v513 = vunpack.c.l.b16 %v152
    %v514 = vunpack.c.l.b16 %v153
    %v515 = vunpack.c.l.b16 %v154
    %v516 = vunpack.c.l.b16 %v155
    %v517 = vunpack.c.l.b16 %v156
    %v518 = vunpack.c.l.b16 %v157
    %v519 = vunpack.c.l.b16 %v158
    %v520 = vunpack.c.l.b16 %v159
    %v521 = vunpack.c.l.b16 %v160
    %v522 = vunpack.c.l.b16 %v161
    %v523 = vunpack.c.l.b16 %v162
    %v524 = vunpack.c.l.b16 %v163
    %v525 = vunpack.c.l.b16 %v164
    %v526 = vunpack.c.l.b16 %v165
    %v527 = vunpack.c.l.b16 %v166
    %v528 = vunpack.c.l.b16 %v167
    %v529 = vunpack.c.l.b16 %v168
    %v530 = vunpack.c.l.b16 %v169
    %v531 = vunpack.c.l.b16 %v170
    %v532 = vunpack.c.l.b16 %v171
    %v533 = vunpack.c.l.b16 %v172
    %v534 = vunpack.c.l.b16 %v173
    %v535 = vunpack.c.l.b16 %v174
    %v536 = vunpack.c.l.b16 %v175
    %v537 = vunpack.c.l.b16 %v176
    %v538 = vunpack.c.l.b16 %v177
    %v539 = vunpack.c.l.b16 %v178
    %v540 = vunpack.c.l.b16 %v179
    %v541 = vunpack.c.l.b16 %v180
    %v542 = vunpack.c.l.b16 %v181
    %v543 = vunpack.c.l.b16 %v182
    %v544 = vunpack.c.l.b16 %v183
    %v545 = vunpack.c.l.b16 %v184
    %v546 = vunpack.c.l.b16 %v185
    %v547 = vunpack.c.l.b16 %v186
    %v548 = vunpack.c.l.b16 %v187
    %v549 = vunpack.c.l.b16 %v188
    %v550 = vunpack.c.l.b16 %v189
    %v551 = vunpack.c.l.b16 %v190
    %v552 = vunpack.c.l.b16 %v191
    %v553 = vunpack.c.l.b16 %v192
    %v554 = vunpack.c.l.b16 %v193
    %v555 = vunpack.c.l.b16 %v194
    %v556 = vunpack.c.l.b16 %v195
    %v557 = vunpack.c.l.b16 %v196
    %v558 = vunpack.c.l.b16 %v197
    %v559 = vunpack.c.l.b16 %v198
    %v560 = vunpack.c.l.b16 %v199
    %v561 = vunpack.c.l.b16 %v200
    %v562 = vunpack.c.l.b16 %v201
    %v563 = vunpack.c.l.b16 %v202
    %v564 = vunpack.c.l.b16 %v203
    %v565 = vunpack.c.l.b16 %v204
    %v566 = vunpack.c.l.b16 %v205
    %v567 = vunpack.c.l.b16 %v206
    %v568 = vunpack.c.l.b16 %v207
    %v569 = vunpack.c.l.b16 %v208
    %v570 = vunpack.c.l.b16 %v209
    %v571 = vunpack.c.l.b16 %v210
    %v572 = vunpack.c.l.b16 %v211
    %v573 = vunpack.c.l.b16 %v212
    %v574 = vunpack.c.l.b16 %v213
    %v575 = vunpack.c.l.b16 %v214
    %v576 = vunpack.c.l.b16 %v215
    %v577 = vunpack.c.l.b16 %v216
    %v578 = vunpack.c.l.b16 %v217
    %v579 = vunpack.c.l.b16 %v218
    %v580 = vunpack.c.l.b16 %v219
    %v581 = vunpack.c.l.b16 %v220
    %v582 = vunpack.c.l.b16 %v221
    %v583 = vunpack.c.l.b16 %v222
    %v584 = vunpack.c.l.b16 %v223
    %v585 = vunpack.c.l.b16 %v224
    %v586 = vunpack.c.l.b16 %v225
    %v587 = vunpack.c.l.b16 %v226
    %v588 = vunpack.c.l.b16 %v227
    %v589 = vunpack.c.l.b16 %v228
    %v590 = vunpack.c.l.b16 %v229
    %v591 = vunpack.c.l.b16 %v230
    %v592 = vunpack.c.l.b16 %v231
    %v593 = vunpack.c.l.b16 %v232
    %v594 = vunpack.c.l.b16 %v233
    %v595 = vunpack.c.l.b16 %v234
    %v596 = vunpack.c.l.b16 %v235
    %v597 = vunpack.c.l.b16 %v236
    %v598 = vunpack.c.l.b16 %v237
    %v599 = vunpack.c.l.b16 %v238
    %v600 = vunpack.c.l.b16 %v239
    %v601 = vunpack.c.l.b16 %v240
    %v602 = vunpack.c.l.b16 %v241
    %v603 = vunpack.c.l.b16 %v242
    %v604 = vunpack.c.l.b16 %v243
    %v605 = vunpack.c.l.b16 %v244
    %v606 = vunpack.c.l.b16 %v245
    %v607 = vunpack.c.l.b16 %v246
    %v608 = vunpack.c.l.b16 %v247
    %v609 = vunpack.c.l.b16 %v248
    %v610 = vpack.c.b16 %v483, %v482
    %v611 = vpack.c.b16 %v485, %v484
    %v612 = vpack.c.b16 %v487, %v486
    %v613 = vpack.c.b16 %v489, %v488
    %v614 = vpack.c.b16 %v491, %v490
    %v615 = vpack.c.b16 %v493, %v492
    %v616 = vpack.c.b16 %v495, %v494
    %v617 = vpack.c.b16 %v497, %v496
    %v618 = vpack.c.b16 %v499, %v498
    %v619 = vpack.c.b16 %v501, %v500
    %v620 = vpack.c.b16 %v503, %v502
    %v621 = vpack.c.b16 %v505, %v504
    %v622 = vpack.c.b16 %v507, %v506
    %v623 = vpack.c.b16 %v509, %v508
    %v624 = vpack.c.b16 %v511, %v510
    %v625 = vpack.c.b16 %v513, %v512
    %v626 = vpack.c.b16 %v515, %v514
    %v627 = vpack.c.b16 %v517, %v516
    %v628 = vpack.c.b16 %v519, %v518
    %v629 = vpack.c.b16 %v521, %v520
    %v630 = vpack.c.b16 %v523, %v522
    %v631 = vpack.c.b16 %v525, %v524
    %v632 = vpack.c.b16 %v527, %v526
    %v633 = vpack.c.b16 %v529, %v528
    %v634 = vpack.c.b16 %v531, %v530
    %v635 = vpack.c.b16 %v533, %v532
    %v636 = vpack.c.b16 %v535, %v534
    %v637 = vpack.c.b16 %v537, %v536
    %v638 = vpack.c.b16 %v539, %v538
    %v639 = vpack.c.b16 %v541, %v540
    %v640 = vpack.c.b16 %v543, %v542
    %v641 = vpack.c.b16 %v545, %v544
    %v642 = vpack.c.b16 %v547, %v546
    %v643 = vpack.c.b16 %v549, %v548
    %v644 = vpack.c.b16 %v551, %v550
    %v645 = vpack.c.b16 %v553, %v552
    %v646 = vpack.c.b16 %v555, %v554
    %v647 = vpack.c.b16 %v557, %v556
    %v648 = vpack.c.b16 %v559, %v558
    %v649 = vpack.c.b16 %v561, %v560
    %v650 = vpack.c.b16 %v563, %v562
    %v651 = vpack.c.b16 %v565, %v564
    %v652 = vpack.c.b16 %v567, %v566
    %v653 = vpack.c.b16 %v569, %v568
    %v654 = vpack.c.b16 %v571, %v570
    %v655 = vpack.c.b16 %v573, %v572
    %v656 = vpack.c.b16 %v575, %v574
    %v657 = vpack.c.b16 %v577, %v576
    %v658 = vpack.c.b16 %v579, %v578
    %v659 = vpack.c.b16 %v581, %v580
    %v660 = vpack.c.b16 %v583, %v582
    %v661 = vpack.c.b16 %v585, %v584
    %v662 = vpack.c.b16 %v587, %v586
    %v663 = vpack.c.b16 %v589, %v588
    %v664 = vpack.c.b16 %v591, %v590
    %v665 = vpack.c.b16 %v593, %v592
    %v666 = vpack.c.b16 %v595, %v594
    %v667 = vpack.c.b16 %v597, %v596
    %v668 = vpack.c.b16 %v599, %v598
    %v669 = vpack.c.b16 %v601, %v600
    %v670 = vpack.c.b16 %v603, %v602
    %v671 = vpack.c.b16 %v605, %v604
    %v672 = vpack.c.b16 %v607, %v606
    %v673 = vpack.c.b16 %v609, %v608
    %738 = vmatprep.subr.bf16.mxu0 0
    %739 = vmatpush1.bf16.msra.mxu0 %v610
    %740 = vmatprep.subr.bf16.mxu0 0
    %741 = vmatpush1.bf16.msra.mxu0 %v611
    %742 = vmatprep.subr.bf16.mxu0 0
    %743 = vmatpush1.bf16.msra.mxu0 %v612
    %744 = vmatprep.subr.bf16.mxu0 0
    %745 = vmatpush1.bf16.msra.mxu0 %v613
    %746 = vmatprep.subr.bf16.mxu0 0
    %747 = vmatpush1.bf16.msra.mxu0 %v614
    %748 = vmatprep.subr.bf16.mxu0 0
    %749 = vmatpush1.bf16.msra.mxu0 %v615
    %750 = vmatprep.subr.bf16.mxu0 0
    %751 = vmatpush1.bf16.msra.mxu0 %v616
    %752 = vmatprep.subr.bf16.mxu0 0
    %753 = vmatpush1.bf16.msra.mxu0 %v617
    %754 = vmatprep.subr.bf16.mxu0 0
    %755 = vmatpush1.bf16.msra.mxu0 %v618
    %756 = vmatprep.subr.bf16.mxu0 0
    %757 = vmatpush1.bf16.msra.mxu0 %v619
    %758 = vmatprep.subr.bf16.mxu0 0
    %759 = vmatpush1.bf16.msra.mxu0 %v620
    %760 = vmatprep.subr.bf16.mxu0 0
    %761 = vmatpush1.bf16.msra.mxu0 %v621
    %762 = vmatprep.subr.bf16.mxu0 0
    %763 = vmatpush1.bf16.msra.mxu0 %v622
    %764 = vmatprep.subr.bf16.mxu0 0
    %765 = vmatpush1.bf16.msra.mxu0 %v623
    %766 = vmatprep.subr.bf16.mxu0 0
    %767 = vmatpush1.bf16.msra.mxu0 %v624
    %768 = vmatprep.subr.bf16.mxu0 0
    %769 = vmatpush1.bf16.msra.mxu0 %v625
    %770 = vmatprep.mubr.bf16.mxu0 %v114
    %771 = vmatmul.mubr.bf16.gmra.mrb[0].mxu0 %v113
    %v772 = vpop.f32.mrb[0].mxu0
    %v773 = vadd.f32 %v349, %v772
    %v774 = vpop.f32.mrb[0].mxu0
    %v775 = vpop.f32.mrb[0].mxu0
    %v776 = vpop.f32.mrb[0].mxu0
    %777 = vdwg.mxu0
    %778 = vmatprep.subr.bf16.mxu0 0
    %779 = vmatpush1.bf16.msra.mxu0 %v626
    %780 = vmatprep.subr.bf16.mxu0 0
    %781 = vmatpush1.bf16.msra.mxu0 %v627
    %782 = vmatprep.subr.bf16.mxu0 0
    %783 = vmatpush1.bf16.msra.mxu0 %v628
    %784 = vmatprep.subr.bf16.mxu0 0
    %785 = vmatpush1.bf16.msra.mxu0 %v629
    %786 = vmatprep.subr.bf16.mxu0 0
    %787 = vmatpush1.bf16.msra.mxu0 %v630
    %788 = vmatprep.subr.bf16.mxu0 0
    %789 = vmatpush1.bf16.msra.mxu0 %v631
    %790 = vmatprep.subr.bf16.mxu0 0
    %791 = vmatpush1.bf16.msra.mxu0 %v632
    %792 = vmatprep.subr.bf16.mxu0 0
    %793 = vmatpush1.bf16.msra.mxu0 %v633
    %794 = vmatprep.subr.bf16.mxu0 0
    %795 = vmatpush1.bf16.msra.mxu0 %v634
    %796 = vmatprep.subr.bf16.mxu0 0
    %797 = vmatpush1.bf16.msra.mxu0 %v635
    %798 = vmatprep.subr.bf16.mxu0 0
    %799 = vmatpush1.bf16.msra.mxu0 %v636
    %800 = vmatprep.subr.bf16.mxu0 0
    %801 = vmatpush1.bf16.msra.mxu0 %v637
    %802 = vmatprep.subr.bf16.mxu0 0
    %803 = vmatpush1.bf16.msra.mxu0 %v638
    %804 = vmatprep.subr.bf16.mxu0 0
    %805 = vmatpush1.bf16.msra.mxu0 %v639
    %806 = vmatprep.subr.bf16.mxu0 0
    %807 = vmatpush1.bf16.msra.mxu0 %v640
    %808 = vmatprep.subr.bf16.mxu0 0
    %809 = vmatpush1.bf16.msra.mxu0 %v641
    %810 = vmatprep.mubr.bf16.mxu0 %v116
    %811 = vmatmul.mubr.bf16.gmra.mrb[0].mxu0 %v115
    %v812 = vpop.f32.mrb[0].mxu0
    %v813 = vadd.f32 %v773, %v812
    %v814 = vpop.f32.mrb[0].mxu0
    %v815 = vpop.f32.mrb[0].mxu0
    %v816 = vpop.f32.mrb[0].mxu0
    %817 = vdwg.mxu0
    %818 = vmatprep.subr.bf16.mxu0 0
    %819 = vmatpush1.bf16.msra.mxu0 %v642
    %820 = vmatprep.subr.bf16.mxu0 0
    %821 = vmatpush1.bf16.msra.mxu0 %v643
    %822 = vmatprep.subr.bf16.mxu0 0
    %823 = vmatpush1.bf16.msra.mxu0 %v644
    %824 = vmatprep.subr.bf16.mxu0 0
    %825 = vmatpush1.bf16.msra.mxu0 %v645
    %826 = vmatprep.subr.bf16.mxu0 0
    %827 = vmatpush1.bf16.msra.mxu0 %v646
    %828 = vmatprep.subr.bf16.mxu0 0
    %829 = vmatpush1.bf16.msra.mxu0 %v647
    %830 = vmatprep.subr.bf16.mxu0 0
    %831 = vmatpush1.bf16.msra.mxu0 %v648
    %832 = vmatprep.subr.bf16.mxu0 0
    %833 = vmatpush1.bf16.msra.mxu0 %v649
    %834 = vmatprep.subr.bf16.mxu0 0
    %835 = vmatpush1.bf16.msra.mxu0 %v650
    %836 = vmatprep.subr.bf16.mxu0 0
    %837 = vmatpush1.bf16.msra.mxu0 %v651
    %838 = vmatprep.subr.bf16.mxu0 0
    %839 = vmatpush1.bf16.msra.mxu0 %v652
    %840 = vmatprep.subr.bf16.mxu0 0
    %841 = vmatpush1.bf16.msra.mxu0 %v653
    %842 = vmatprep.subr.bf16.mxu0 0
    %843 = vmatpush1.bf16.msra.mxu0 %v654
    %844 = vmatprep.subr.bf16.mxu0 0
    %845 = vmatpush1.bf16.msra.mxu0 %v655
    %846 = vmatprep.subr.bf16.mxu0 0
    %847 = vmatpush1.bf16.msra.mxu0 %v656
    %848 = vmatprep.subr.bf16.mxu0 0
    %849 = vmatpush1.bf16.msra.mxu0 %v657
    %850 = vmatprep.mubr.bf16.mxu0 %v118
    %851 = vmatmul.mubr.bf16.gmra.mrb[0].mxu0 %v117
    %v852 = vpop.f32.mrb[0].mxu0
    %v853 = vadd.f32 %v813, %v852
    %v854 = vpop.f32.mrb[0].mxu0
    %v855 = vpop.f32.mrb[0].mxu0
    %v856 = vpop.f32.mrb[0].mxu0
    %857 = vdwg.mxu0
    %858 = vmatprep.subr.bf16.mxu0 0
    %859 = vmatpush1.bf16.msra.mxu0 %v658
    %860 = vmatprep.subr.bf16.mxu0 0
    %861 = vmatpush1.bf16.msra.mxu0 %v659
    %862 = vmatprep.subr.bf16.mxu0 0
    %863 = vmatpush1.bf16.msra.mxu0 %v660
    %864 = vmatprep.subr.bf16.mxu0 0
    %865 = vmatpush1.bf16.msra.mxu0 %v661
    %866 = vmatprep.subr.bf16.mxu0 0
    %867 = vmatpush1.bf16.msra.mxu0 %v662
    %868 = vmatprep.subr.bf16.mxu0 0
    %869 = vmatpush1.bf16.msra.mxu0 %v663
    %870 = vmatprep.subr.bf16.mxu0 0
    %871 = vmatpush1.bf16.msra.mxu0 %v664
    %872 = vmatprep.subr.bf16.mxu0 0
    %873 = vmatpush1.bf16.msra.mxu0 %v665
    %874 = vmatprep.subr.bf16.mxu0 0
    %875 = vmatpush1.bf16.msra.mxu0 %v666
    %876 = vmatprep.subr.bf16.mxu0 0
    %877 = vmatpush1.bf16.msra.mxu0 %v667
    %878 = vmatprep.subr.bf16.mxu0 0
    %879 = vmatpush1.bf16.msra.mxu0 %v668
    %880 = vmatprep.subr.bf16.mxu0 0
    %881 = vmatpush1.bf16.msra.mxu0 %v669
    %882 = vmatprep.subr.bf16.mxu0 0
    %883 = vmatpush1.bf16.msra.mxu0 %v670
    %884 = vmatprep.subr.bf16.mxu0 0
    %885 = vmatpush1.bf16.msra.mxu0 %v671
    %886 = vmatprep.subr.bf16.mxu0 0
    %887 = vmatpush1.bf16.msra.mxu0 %v672
    %888 = vmatprep.subr.bf16.mxu0 0
    %889 = vmatpush1.bf16.msra.mxu0 %v673
    %890 = vmatprep.mubr.bf16.mxu0 %v120
    %891 = vmatmul.mubr.bf16.gmra.mrb[0].mxu0 %v119
    %v892 = vpop.f32.mrb[0].mxu0
    %v893 = vadd.f32 %v853, %v892
    %v894 = vpop.f32.mrb[0].mxu0
    %v895 = vpop.f32.mrb[0].mxu0
    %v896 = vpop.f32.mrb[0].mxu0
    %897 = vdwg.mxu0
    %v898 = vld [vmem:[%s4] sm:$0x1]
    %v900 = vlaneseq
    %v901 = vshrl.u32 %v900, 7
    %v902 = vsub.s32 0, %v901
    %v903 = vrot.slane %v898, %v902
    %v905 = vadd.f32 %v893, %v903
    %vm906 = vcmp.gt.f32.partialorder %v905, 0.0
    %v907 = vmul.f32 %v905, 0.2
    %v908 = vsel %vm906, %v905, %v907
    %v909 = vld [vmem:[%s5] sm:$0x1]
    %v911 = vlaneseq
    %v912 = vshrl.u32 %v911, 7
    %v913 = vsub.s32 0, %v912
    %v914 = vrot.slane %v909, %v913
    %v916 = vmul.f32 %v908, %v914
    %vm917 = vcmask 1041408
    %v918 = vsel %vm917, %v916, 0.0
    %919 = vadd.xlane.f32.xlu0 %v918
    %v920 = vpop.xlane.xlu0 %919
    %s921 = sld [smem:[#allocation2]]
    %v922 = vstv %s921
    %v923 = vadd.f32 %v920, %v922
    %vm924 = vcmask 1024
    %925 = vst.msk [vmem:[%s7] sm:$0x3] %vm924, %v923
    // Predicated region
    $region42: #{tpu_custom_call.1} parent=1 // pred_check
      _
    $region43: #{tpu_custom_call.1} parent=1 // pred_check_branch
      %927 = sbr.rel (0) target = $region45
    $region44: #{tpu_custom_call.1} parent=1 // pred_region
      _
    $region45: #{tpu_custom_call.1} parent=1 // pred_fallthru
      _
    // Predicated region
    $region46: #{tpu_custom_call.1} parent=1 // pred_check
      _
    $region47: #{tpu_custom_call.1} parent=1 // pred_check_branch
      %929 = sbr.rel (0) target = $region49
    $region48: #{tpu_custom_call.1} parent=1 // pred_region
      _
    $region49: #{tpu_custom_call.1} parent=1 // pred_fallthru
      _
    %930 = vsyncpa [#allocation4], 1
    %931 = vsyncpa [#allocation6], 1

</llo_original>
